<compile_context>
chip_gen: v6e
topology: v6e:2x2x1
jax: 0.10.0
libtpu: 0.0.40
codegen_flags: <defaults>
</compile_context>

<pallas_src>
import jax
import jax.numpy as jnp
from jax.experimental import pallas as pl
from jax.experimental.pallas import tpu as pltpu


LEAKY_SLOPE = 0.01      # nn.LeakyReLU() default negative_slope
LANE = 128              # lane width; output-feature axes padded to multiples of this
SUBLANE_BF16 = 16       # bf16 rows per sublane tile; batch tiles aligned to this


def _round_up(n, m):
    return ((n + m - 1) // m) * m


def _tpu_budget():
    """(vmem_limit_bytes, tensorcores_per_chip) chosen per TPU generation."""
    kind = ""
    try:
        kind = jax.devices()[0].device_kind.lower()
    except Exception:
        pass
    if "v7" in kind:
        # 64 MiB physical VMEM per TC on v7x -> stay well below; 2 TCs per chip.
        return 48 * 1024 * 1024, 2
    if ("v4" in kind) or ("v5p" in kind):
        # 128 MiB VMEM, megacore (2 TCs).
        return 64 * 1024 * 1024, 2
    # v5e / v6e: 128 MiB physical VMEM, 1 TC per chip.
    return 64 * 1024 * 1024, 1


def _choose_tile_b(B, x_dim, h_p, z_p, vmem_budget, num_cores):
    """Pick the batch tile from an explicit VMEM byte budget (16-row aligned)."""
    # Per-batch-row VMEM bytes: double-buffered bf16 x tile, double-buffered f32
    # output tile, plus the f32 hidden intermediate.
    per_row = 2 * x_dim * 2 + 2 * z_p * 4 + h_p * 4
    # Resident (single-buffered) weights + f32 biases.
    resident = (x_dim * h_p + h_p * z_p) * 2 + (h_p + z_p) * 4
    headroom = 2 * 1024 * 1024
    avail = max(vmem_budget - resident - headroom, SUBLANE_BF16 * per_row)
    cap = max(SUBLANE_BF16, (avail // per_row) // SUBLANE_BF16 * SUBLANE_BF16)
    cap = min(cap, 2048)  # beyond this, per-step overhead is already negligible

    b16 = _round_up(B, SUBLANE_BF16)
    if num_cores > 1 and b16 > SUBLANE_BF16:
        # Ensure >= num_cores grid steps so both TensorCores get work (v7x).
        want = _round_up(-(-b16 // num_cores), SUBLANE_BF16)
        tile = min(cap, want)
    else:
        tile = min(cap, b16)
    return max(SUBLANE_BF16, tile)


def prepare_params(params, compute_dtype=jnp.bfloat16):
    """Pad / cast the weights ONCE (call outside the per-step forward loop).

    Output-feature axes are zero-padded to the 128-lane boundary (zeros are exact
    through LeakyReLU and the second matmul); x_dim / K is left unpadded because
    a full-array last dim is a legal block extent and the MXU wastes those
    columns either way.
    """
    w1, b1, w21, b21 = params["w1"], params["b1"], params["w21"], params["b21"]
    x_dim, hidden_dim = w1.shape
    z_dim = w21.shape[1]
    h_p = _round_up(hidden_dim, LANE)
    z_p = _round_up(z_dim, LANE)

    prep = {
        "w1": jnp.zeros((x_dim, h_p), compute_dtype)
              .at[:, :hidden_dim].set(w1.astype(compute_dtype)),
        "b1": jnp.zeros((1, h_p), jnp.float32)
              .at[:, :hidden_dim].set(b1.astype(jnp.float32).reshape(1, hidden_dim)),
        "w21": jnp.zeros((h_p, z_p), compute_dtype)
               .at[:hidden_dim, :z_dim].set(w21.astype(compute_dtype)),
        "b21": jnp.zeros((1, z_p), jnp.float32)
               .at[:, :z_dim].set(b21.astype(jnp.float32).reshape(1, z_dim)),
    }
    dims = {"x_dim": x_dim, "hidden_dim": hidden_dim, "z_dim": z_dim,
            "h_p": h_p, "z_p": z_p}
    return prep, dims


def encoder_kernel(x_ref, w1_ref, b1_ref, w21_ref, b21_ref, zloc_ref):
    # fc1: bf16 operands on the MXU, f32 accumulation; bias + LeakyReLU in f32.
    h = jnp.dot(x_ref[...], w1_ref[...],
                preferred_element_type=jnp.float32) + b1_ref[...]
    h = jnp.maximum(h, LEAKY_SLOPE * h)          # LeakyReLU: single VALU max

    # batchnorm1 = Identity (use_batchnorm=False); middle = Identity (n_layers=1)
    # TODO(synk): BatchNorm1d / n_layers>1 middle stack not implemented (defaults only).

    # fc21 -> z_loc; bf16 operands, f32 accumulation, f32 bias.
    z = jnp.dot(h.astype(w21_ref.dtype), w21_ref[...],
                preferred_element_type=jnp.float32) + b21_ref[...]
    zloc_ref[...] = z.astype(zloc_ref.dtype)


def encoder_forward(x, prep, dims, *, bandwidth=0.1,
                    compute_dtype=jnp.bfloat16, tile_b=None):
    """x: [B, x_dim] float32 -> (z_loc [B, z_dim], z_scale [B, z_dim]).

    `prep, dims = prepare_params(params)` must be computed once per weight set.
    Returns the (loc, scale) parameterization of the Normal posterior; the
    module's penalty_dist is the same distribution.
    """
    B, x_dim = x.shape
    assert x_dim == dims["x_dim"]
    hidden_dim, z_dim = dims["hidden_dim"], dims["z_dim"]
    h_p, z_p = dims["h_p"], dims["z_p"]

    vmem_budget, num_cores = _tpu_budget()
    if tile_b is None:
        tile_b = _choose_tile_b(B, x_dim, h_p, z_p, vmem_budget, num_cores)
    b_pad = _round_up(B, tile_b)
    grid = (b_pad // tile_b,)

    # Only per-call input work: cast x to bf16 (+ batch-row pad if needed).
    x_c = x.astype(compute_dtype)
    if b_pad != B:
        x_c = jnp.zeros((b_pad, x_dim), compute_dtype).at[:B].set(x_c)

    def _run(single_buffer_weights):
        if single_buffer_weights:
            # Resident operands: block index never changes -> one buffer is enough.
            res = lambda shape: pl.BlockSpec(shape, lambda i: (0, 0),
                                             pipeline_mode=pl.Buffered(1))
        else:
            res = lambda shape: pl.BlockSpec(shape, lambda i: (0, 0))
        return pl.pallas_call(
            encoder_kernel,
            out_shape=jax.ShapeDtypeStruct((b_pad, z_p), jnp.float32),
            grid_spec=pltpu.PrefetchScalarGridSpec(
                num_scalar_prefetch=0,
                grid=grid,
                in_specs=[
                    pl.BlockSpec((tile_b, x_dim), lambda i: (i, 0)),  # x, tiled over batch
                    res((x_dim, h_p)),                                # W1 (resident)
                    res((1, h_p)),                                    # b1
                    res((h_p, z_p)),                                  # W21 (resident)
                    res((1, z_p)),                                    # b21
                ],
                out_specs=pl.BlockSpec((tile_b, z_p), lambda i: (i, 0)),
            ),
            compiler_params=pltpu.CompilerParams(
                dimension_semantics=("parallel",),        # megacore-shardable batch axis
                vmem_limit_bytes=vmem_budget,             # per-generation budget
            ),
        )(x_c, prep["w1"], prep["b1"], prep["w21"], prep["b21"])

    try:
        z_loc_padded = _run(True)
    except Exception:
        # Conservative fallback: default double-buffered resident weights
        # (tiny VMEM cost at these sizes) if Buffered(1) is rejected.
        z_loc_padded = _run(False)

    z_loc = z_loc_padded[:B, :z_dim]
    # z_scale is a constant (bandwidth); broadcast in the wrapper -- no kernel
    # work and no redundant HBM writeback.
    z_scale = jnp.full_like(z_loc, bandwidth)
    # TODO(synk): dist.Normal is a distribution object; we return its (loc, scale)
    # parameterization instead, which fully determines it (posterior == penalty_dist).
    return z_loc, z_scale


def init_params(key, x_dim, hidden_dim, z_dim):
    """Deterministic synthetic init; weights stored as [in_dim, out_dim]."""
    ks = jax.random.split(key, 4)
    scale = 0.1
    return {
        "w1":  scale * jax.random.normal(ks[0], (x_dim, hidden_dim), jnp.float32),
        "b1":  scale * jax.random.normal(ks[1], (1, hidden_dim), jnp.float32),
        "w21": scale * jax.random.normal(ks[2], (hidden_dim, z_dim), jnp.float32),
        "b21": scale * jax.random.normal(ks[3], (1, z_dim), jnp.float32),
    }


def _leaky_relu(v):
    return jnp.where(v > 0, v, LEAKY_SLOPE * v)


def reference_f32(x, p, bandwidth=0.1):
    h = _leaky_relu(x @ p["w1"] + p["b1"])
    z_loc = h @ p["w21"] + p["b21"]
    return z_loc, jnp.full_like(z_loc, bandwidth)


def reference_bf16(x, p, bandwidth=0.1):
    """Same bf16-operand / f32-accumulate recipe as the kernel."""
    bf = jnp.bfloat16
    h = jnp.dot(x.astype(bf), p["w1"].astype(bf),
                preferred_element_type=jnp.float32) + p["b1"]
    h = _leaky_relu(h)
    z_loc = jnp.dot(h.astype(bf), p["w21"].astype(bf),
                    preferred_element_type=jnp.float32) + p["b21"]
    return z_loc, jnp.full_like(z_loc, bandwidth)


if __name__ == "__main__":
    B, x_dim, hidden_dim, z_dim = 16, 64, 32, 16
    bandwidth = 0.1

    key = jax.random.PRNGKey(0)
    kx, kp = jax.random.split(key)
    x = jax.random.normal(kx, (B, x_dim), jnp.float32)
    params = init_params(kp, x_dim, hidden_dim, z_dim)

    # Hoisted weight padding/casting: done once per weight set, reused by forwards.
    prep, dims = prepare_params(params)
    jax.block_until_ready(prep)

    z_loc, z_scale = encoder_forward(x, prep, dims, bandwidth=bandwidth)
    jax.block_until_ready((z_loc, z_scale))

    assert z_loc.shape == (B, z_dim) and z_scale.shape == (B, z_dim)

    # Tight check vs. a reference using the identical bf16-operand recipe.
    loc_bf, _ = reference_bf16(x, params, bandwidth)
    assert jnp.allclose(z_loc, loc_bf, atol=1e-4, rtol=1e-4), \
        float(jnp.max(jnp.abs(z_loc - loc_bf)))

    # Sanity check vs. the full-precision PyTorch-equivalent math.
    loc_f32, _ = reference_f32(x, params, bandwidth)
    assert jnp.allclose(z_loc, loc_f32, atol=5e-2, rtol=5e-2), \
        float(jnp.max(jnp.abs(z_loc - loc_f32)))

    assert bool(jnp.all(z_scale == jnp.float32(bandwidth)))

    print("KERNEL_OK")
</pallas_src>

<mosaic_0001>
module attributes {stable_mosaic.version = 11 : i64} {
  func.func @encoder_kernel(%arg0: i32, %arg1: memref<16x64xbf16, #tpu.memory_space<vmem>>, %arg2: memref<64x128xbf16, #tpu.memory_space<vmem>>, %arg3: memref<1x128xf32, #tpu.memory_space<vmem>>, %arg4: memref<128x128xbf16, #tpu.memory_space<vmem>>, %arg5: memref<1x128xf32, #tpu.memory_space<vmem>>, %arg6: memref<16x128xf32, #tpu.memory_space<vmem>>) attributes {dimension_semantics = [#tpu.dimension_semantics<parallel>], iteration_bounds = array<i64: 1>, scalar_prefetch = 0 : i64, scratch_operands = 0 : i64, tpu.core_type = #tpu.core_type<tc>, window_params = [{transform_indices = @transform_0, window_bounds = array<i64: 16, 64>}, {pipeline_mode = #tpu.pipeline_mode<synchronous>, transform_indices = @transform_1, window_bounds = array<i64: 64, 128>}, {pipeline_mode = #tpu.pipeline_mode<synchronous>, transform_indices = @transform_2, window_bounds = array<i64: 1, 128>}, {pipeline_mode = #tpu.pipeline_mode<synchronous>, transform_indices = @transform_3, window_bounds = array<i64: 128, 128>}, {pipeline_mode = #tpu.pipeline_mode<synchronous>, transform_indices = @transform_4, window_bounds = array<i64: 1, 128>}, {transform_indices = @transform_5, window_bounds = array<i64: 16, 128>}]} {
    %c0 = arith.constant 0 : index
    %c0_0 = arith.constant 0 : index
    %0 = vector.load %arg1[%c0, %c0_0] : memref<16x64xbf16, #tpu.memory_space<vmem>>, vector<16x64xbf16>
    %c0_1 = arith.constant 0 : index
    %c0_2 = arith.constant 0 : index
    %1 = vector.load %arg2[%c0_1, %c0_2] : memref<64x128xbf16, #tpu.memory_space<vmem>>, vector<64x128xbf16>
    %cst = arith.constant dense<0.000000e+00> : vector<16x128xf32>
    %2 = tpu.matmul %0, %1, %cst {dimension_numbers = #tpu.dot_dimension_numbers<[1], [0], [0], [1], [0, 0, 1, 1], [], []>} : vector<16x64xbf16>, vector<64x128xbf16>, vector<16x128xf32> -> vector<16x128xf32>
    %c0_3 = arith.constant 0 : index
    %c0_4 = arith.constant 0 : index
    %3 = vector.load %arg3[%c0_3, %c0_4] : memref<1x128xf32, #tpu.memory_space<vmem>>, vector<1x128xf32>
    %4 = vector.broadcast %3 : vector<1x128xf32> to vector<16x128xf32>
    %5 = arith.addf %2, %4 : vector<16x128xf32>
    %cst_5 = arith.constant 0.00999999977 : f32
    %6 = vector.broadcast %cst_5 : f32 to vector<16x128xf32>
    %7 = arith.mulf %6, %5 : vector<16x128xf32>
    %8 = arith.maximumf %5, %7 : vector<16x128xf32>
    %9 = arith.truncf %8 : vector<16x128xf32> to vector<16x128xbf16>
    %c0_6 = arith.constant 0 : index
    %c0_7 = arith.constant 0 : index
    %10 = vector.load %arg4[%c0_6, %c0_7] : memref<128x128xbf16, #tpu.memory_space<vmem>>, vector<128x128xbf16>
    %cst_8 = arith.constant dense<0.000000e+00> : vector<16x128xf32>
    %11 = tpu.matmul %9, %10, %cst_8 {dimension_numbers = #tpu.dot_dimension_numbers<[1], [0], [0], [1], [0, 0, 1, 1], [], []>} : vector<16x128xbf16>, vector<128x128xbf16>, vector<16x128xf32> -> vector<16x128xf32>
    %c0_9 = arith.constant 0 : index
    %c0_10 = arith.constant 0 : index
    %12 = vector.load %arg5[%c0_9, %c0_10] : memref<1x128xf32, #tpu.memory_space<vmem>>, vector<1x128xf32>
    %13 = vector.broadcast %12 : vector<1x128xf32> to vector<16x128xf32>
    %14 = arith.addf %11, %13 : vector<16x128xf32>
    %c0_11 = arith.constant 0 : index
    %c0_12 = arith.constant 0 : index
    %15 = vector.load %arg6[%c0_11, %c0_12] : memref<16x128xf32, #tpu.memory_space<vmem>>, vector<16x128xf32>
    tpu.vector_store %arg6[%c0_11, %c0_12], %14 {strides = array<i32>} : memref<16x128xf32, #tpu.memory_space<vmem>>, vector<16x128xf32>,
    return
  }
  func.func @transform_0(%arg0: i32) -> (i32, i32) {
    %c0_i32 = arith.constant 0 : i32
    %c0_i32_0 = arith.constant 0 : i32
    return %arg0, %c0_i32 : i32, i32
  }
  func.func @transform_1(%arg0: i32) -> (i32, i32) {
    %c0_i32 = arith.constant 0 : i32
    %c0_i32_0 = arith.constant 0 : i32
    %c0_i32_1 = arith.constant 0 : i32
    return %c0_i32, %c0_i32_0 : i32, i32
  }
  func.func @transform_2(%arg0: i32) -> (i32, i32) {
    %c0_i32 = arith.constant 0 : i32
    %c0_i32_0 = arith.constant 0 : i32
    %c0_i32_1 = arith.constant 0 : i32
    return %c0_i32, %c0_i32_0 : i32, i32
  }
  func.func @transform_3(%arg0: i32) -> (i32, i32) {
    %c0_i32 = arith.constant 0 : i32
    %c0_i32_0 = arith.constant 0 : i32
    %c0_i32_1 = arith.constant 0 : i32
    return %c0_i32, %c0_i32_0 : i32, i32
  }
  func.func @transform_4(%arg0: i32) -> (i32, i32) {
    %c0_i32 = arith.constant 0 : i32
    %c0_i32_0 = arith.constant 0 : i32
    %c0_i32_1 = arith.constant 0 : i32
    return %c0_i32, %c0_i32_0 : i32, i32
  }
  func.func @transform_5(%arg0: i32) -> (i32, i32) {
    %c0_i32 = arith.constant 0 : i32
    %c0_i32_0 = arith.constant 0 : i32
    return %arg0, %c0_i32 : i32, i32
  }
}

module attributes {stable_mosaic.version = 11 : i64} {
  func.func @encoder_kernel(%arg0: i32, %arg1: memref<16x64xbf16, #tpu.memory_space<vmem>>, %arg2: memref<64x128xbf16, #tpu.memory_space<vmem>>, %arg3: memref<1x128xf32, #tpu.memory_space<vmem>>, %arg4: memref<128x128xbf16, #tpu.memory_space<vmem>>, %arg5: memref<1x128xf32, #tpu.memory_space<vmem>>, %arg6: memref<16x128xf32, #tpu.memory_space<vmem>>) attributes {dimension_semantics = [#tpu.dimension_semantics<parallel>], iteration_bounds = array<i64: 1>, scalar_prefetch = 0 : i64, scratch_operands = 0 : i64, tpu.core_type = #tpu.core_type<tc>, window_params = [{transform_indices = @transform_0, window_bounds = array<i64: 16, 64>}, {pipeline_mode = #tpu.pipeline_mode<synchronous>, transform_indices = @transform_1, window_bounds = array<i64: 64, 128>}, {pipeline_mode = #tpu.pipeline_mode<synchronous>, transform_indices = @transform_2, window_bounds = array<i64: 1, 128>}, {pipeline_mode = #tpu.pipeline_mode<synchronous>, transform_indices = @transform_3, window_bounds = array<i64: 128, 128>}, {pipeline_mode = #tpu.pipeline_mode<synchronous>, transform_indices = @transform_4, window_bounds = array<i64: 1, 128>}, {transform_indices = @transform_5, window_bounds = array<i64: 16, 128>}]} {
    %c0 = arith.constant 0 : index
    %c0_0 = arith.constant 0 : index
    %0 = vector.load %arg1[%c0, %c0_0] : memref<16x64xbf16, #tpu.memory_space<vmem>>, vector<16x64xbf16>
    %c0_1 = arith.constant 0 : index
    %c0_2 = arith.constant 0 : index
    %1 = vector.load %arg2[%c0_1, %c0_2] : memref<64x128xbf16, #tpu.memory_space<vmem>>, vector<64x128xbf16>
    %cst = arith.constant dense<0.000000e+00> : vector<16x128xf32>
    %2 = tpu.matmul %0, %1, %cst {dimension_numbers = #tpu.dot_dimension_numbers<[1], [0], [0], [1], [0, 0, 1, 1], [], []>} : vector<16x64xbf16>, vector<64x128xbf16>, vector<16x128xf32> -> vector<16x128xf32>
    %c0_3 = arith.constant 0 : index
    %c0_4 = arith.constant 0 : index
    %3 = vector.load %arg3[%c0_3, %c0_4] : memref<1x128xf32, #tpu.memory_space<vmem>>, vector<1x128xf32>
    %4 = vector.broadcast %3 : vector<1x128xf32> to vector<16x128xf32>
    %5 = arith.addf %2, %4 : vector<16x128xf32>
    %cst_5 = arith.constant 0.00999999977 : f32
    %6 = vector.broadcast %cst_5 : f32 to vector<16x128xf32>
    %7 = arith.mulf %6, %5 : vector<16x128xf32>
    %8 = arith.maximumf %5, %7 : vector<16x128xf32>
    %9 = arith.truncf %8 : vector<16x128xf32> to vector<16x128xbf16>
    %c0_6 = arith.constant 0 : index
    %c0_7 = arith.constant 0 : index
    %10 = vector.load %arg4[%c0_6, %c0_7] : memref<128x128xbf16, #tpu.memory_space<vmem>>, vector<128x128xbf16>
    %cst_8 = arith.constant dense<0.000000e+00> : vector<16x128xf32>
    %11 = tpu.matmul %9, %10, %cst_8 {dimension_numbers = #tpu.dot_dimension_numbers<[1], [0], [0], [1], [0, 0, 1, 1], [], []>} : vector<16x128xbf16>, vector<128x128xbf16>, vector<16x128xf32> -> vector<16x128xf32>
    %c0_9 = arith.constant 0 : index
    %c0_10 = arith.constant 0 : index
    %12 = vector.load %arg5[%c0_9, %c0_10] : memref<1x128xf32, #tpu.memory_space<vmem>>, vector<1x128xf32>
    %13 = vector.broadcast %12 : vector<1x128xf32> to vector<16x128xf32>
    %14 = arith.addf %11, %13 : vector<16x128xf32>
    %c0_11 = arith.constant 0 : index
    %c0_12 = arith.constant 0 : index
    %15 = vector.load %arg6[%c0_11, %c0_12] : memref<16x128xf32, #tpu.memory_space<vmem>>, vector<16x128xf32>
    tpu.vector_store %arg6[%c0_11, %c0_12], %14 {strides = array<i32>} : memref<16x128xf32, #tpu.memory_space<vmem>>, vector<16x128xf32>,
    return
  }
  func.func @transform_0(%arg0: i32) -> (i32, i32) {
    %c0_i32 = arith.constant 0 : i32
    %c0_i32_0 = arith.constant 0 : i32
    return %arg0, %c0_i32 : i32, i32
  }
  func.func @transform_1(%arg0: i32) -> (i32, i32) {
    %c0_i32 = arith.constant 0 : i32
    %c0_i32_0 = arith.constant 0 : i32
    %c0_i32_1 = arith.constant 0 : i32
    return %c0_i32, %c0_i32_0 : i32, i32
  }
  func.func @transform_2(%arg0: i32) -> (i32, i32) {
    %c0_i32 = arith.constant 0 : i32
    %c0_i32_0 = arith.constant 0 : i32
    %c0_i32_1 = arith.constant 0 : i32
    return %c0_i32, %c0_i32_0 : i32, i32
  }
  func.func @transform_3(%arg0: i32) -> (i32, i32) {
    %c0_i32 = arith.constant 0 : i32
    %c0_i32_0 = arith.constant 0 : i32
    %c0_i32_1 = arith.constant 0 : i32
    return %c0_i32, %c0_i32_0 : i32, i32
  }
  func.func @transform_4(%arg0: i32) -> (i32, i32) {
    %c0_i32 = arith.constant 0 : i32
    %c0_i32_0 = arith.constant 0 : i32
    %c0_i32_1 = arith.constant 0 : i32
    return %c0_i32, %c0_i32_0 : i32, i32
  }
  func.func @transform_5(%arg0: i32) -> (i32, i32) {
    %c0_i32 = arith.constant 0 : i32
    %c0_i32_0 = arith.constant 0 : i32
    return %arg0, %c0_i32 : i32, i32
  }
}

</mosaic_0001>

<llo_original>
// kernel: tpu_custom_call.1
$region0: #{tpu_custom_call.1}
  #allocation0 [shape = 'u32[]', space=smem, size = 0x4, offset = 0x4, fixed_abs, tag = 'smem constant byte address 0x4 - core index']
  #allocation1 [shape = 'u32[144,128]{1,0:T(1,128)}', space=vmem, size = 0x12000, scoped, tag = 'internal scratch']
  %s0 = inlined_call_operand.hbm [shape: bf16[16,64], index: 0, kind: input, shape index: {}]
  %s1 = inlined_call_operand.hbm [shape: bf16[64,128], index: 1, kind: input, shape index: {}]
  %s2 = inlined_call_operand.vmem [shape: f32[1,128], index: 2, kind: input, shape index: {}]
  %s3 = inlined_call_operand.hbm [shape: bf16[128,128], index: 3, kind: input, shape index: {}]
  %s4 = inlined_call_operand.vmem [shape: f32[1,128], index: 4, kind: input, shape index: {}]
  %s5 = inlined_call_operand.hbm [shape: f32[16,128], index: 5, kind: output, shape index: {}]
  %s6 = sld [smem:[#allocation0]]
  $region42: #{tpu_custom_call.1} parent=0
    _
  %s8 = ssub.s32 1, %s6
  %s9 = scalar_select 0, %s8, %s6
  $region1: #{tpu_custom_call.1} parent=0
    #allocation2 [shape = 'u8[4096]{0}', space=vmem, size = 0x1000, scoped, tag = 'input window, operand 0, single buffered']
    #allocation3 [shape = 's32[1]{0}', space=sflag, size = 0x4, scoped, tag = 'scoped memory for tpu_custom_call.1']
    #allocation4 [shape = 's32[1]{0}', space=sflag, size = 0x4, scoped, tag = 'scoped memory for tpu_custom_call.1']
    #allocation5 [shape = 'u8[16384]{0}', space=vmem, size = 0x4000, scoped, tag = 'input window, operand 1, single buffered']
    #allocation6 [shape = 's32[1]{0}', space=sflag, size = 0x4, scoped, tag = 'scoped memory for tpu_custom_call.1']
    #allocation7 [shape = 'u8[32768]{0}', space=vmem, size = 0x8000, scoped, tag = 'input window, operand 3, single buffered']
    #allocation8 [shape = 'u8[8192]{0}', space=vmem, size = 0x2000, scoped, tag = 'output window, operand 0, single buffered']
    %10 = vsyncpa [#allocation3], 0
    %11 = vsyncpa [#allocation6], 0
    %12 = vsyncpa [#allocation4], 0
    // Predicated region
    $region2: #{tpu_custom_call.1} parent=1 // pred_check
      _
    $region3: #{tpu_custom_call.1} parent=1 // pred_check_branch
      %14 = sbr.rel (0) target = $region5
    $region4: #{tpu_custom_call.1} parent=1 // pred_region
      %s16 = ssub.s32 128, 128
      %17 = vsyncadd [#allocation3], %s16
      %s18 = sshll.u32 [#allocation2], 4
      %s19 = int_to_ptr.vmem [resolvable:$true] %s18
      %24 = dma.hbm_to_vmem [thread:$0]  %s0, 128, %s19, [#allocation3], 64, 64, 4
    $region5: #{tpu_custom_call.1} parent=1 // pred_fallthru
      _
    // Predicated region
    $region6: #{tpu_custom_call.1} parent=1 // pred_check
      _
    $region7: #{tpu_custom_call.1} parent=1 // pred_check_branch
      %26 = sbr.rel (0) target = $region9
    $region8: #{tpu_custom_call.1} parent=1 // pred_region
      %s28 = ssub.s32 512, 512
      %29 = vsyncadd [#allocation6], %s28
      %s30 = sshll.u32 [#allocation5], 4
      %s31 = int_to_ptr.vmem [resolvable:$true] %s30
      %36 = dma.hbm_to_vmem [thread:$0]  %s1, 512, %s31, [#allocation6], 64, 64, 4
    $region9: #{tpu_custom_call.1} parent=1 // pred_fallthru
      _
    // Predicated region
    $region10: #{tpu_custom_call.1} parent=1 // pred_check
      _
    $region11: #{tpu_custom_call.1} parent=1 // pred_check_branch
      %38 = sbr.rel (0) target = $region13
    $region12: #{tpu_custom_call.1} parent=1 // pred_region
      _
    $region13: #{tpu_custom_call.1} parent=1 // pred_fallthru
      _
    // Predicated region
    $region14: #{tpu_custom_call.1} parent=1 // pred_check
      _
    $region15: #{tpu_custom_call.1} parent=1 // pred_check_branch
      %40 = sbr.rel (0) target = $region17
    $region16: #{tpu_custom_call.1} parent=1 // pred_region
      %s42 = ssub.s32 1024, 1024
      %43 = vsyncadd [#allocation6], %s42
      %s44 = sshll.u32 [#allocation7], 4
      %s45 = int_to_ptr.vmem [resolvable:$true] %s44
      %50 = dma.hbm_to_vmem [thread:$0]  %s3, 1024, %s45, [#allocation6], 64, 64, 4
    $region17: #{tpu_custom_call.1} parent=1 // pred_fallthru
      _
    // Predicated region
    $region18: #{tpu_custom_call.1} parent=1 // pred_check
      _
    $region19: #{tpu_custom_call.1} parent=1 // pred_check_branch
      %52 = sbr.rel (0) target = $region21
    $region20: #{tpu_custom_call.1} parent=1 // pred_region
      _
    $region21: #{tpu_custom_call.1} parent=1 // pred_fallthru
      _
    // Predicated region
    $region22: #{tpu_custom_call.1} parent=1 // pred_check
      _
    $region23: #{tpu_custom_call.1} parent=1 // pred_check_branch
      %54 = sbr.rel (0) target = $region25
    $region24: #{tpu_custom_call.1} parent=1 // pred_region
      %55 = dma.done [#allocation3], 128
    $region25: #{tpu_custom_call.1} parent=1 // pred_fallthru
      _
    // Predicated region
    $region26: #{tpu_custom_call.1} parent=1 // pred_check
      _
    $region27: #{tpu_custom_call.1} parent=1 // pred_check_branch
      %57 = sbr.rel (0) target = $region29
    $region28: #{tpu_custom_call.1} parent=1 // pred_region
      %58 = dma.done [#allocation6], 512
    $region29: #{tpu_custom_call.1} parent=1 // pred_fallthru
      _
    // Predicated region
    $region30: #{tpu_custom_call.1} parent=1 // pred_check
      _
    $region31: #{tpu_custom_call.1} parent=1 // pred_check_branch
      %60 = sbr.rel (0) target = $region33
    $region32: #{tpu_custom_call.1} parent=1 // pred_region
      %61 = dma.done [#allocation6], 1024
    $region33: #{tpu_custom_call.1} parent=1 // pred_fallthru
      _
    %v63 = vld [vmem:[#allocation2] sm:$0xf]
    %v64 = vld [vmem:[#allocation2 + $0x4] sm:$0xf]
    %v65 = vld [vmem:[#allocation5] sm:$0xf]
    %v66 = vld [vmem:[#allocation5 + $0x4] sm:$0xf]
    %v67 = vld [vmem:[#allocation5 + $0x8] sm:$0xf]
    %v68 = vld [vmem:[#allocation5 + $0xc] sm:$0xf]
    %v69 = vld [vmem:[#allocation5 + $0x10] sm:$0xf]
    %v70 = vld [vmem:[#allocation5 + $0x14] sm:$0xf]
    %v71 = vld [vmem:[#allocation5 + $0x18] sm:$0xf]
    %v72 = vld [vmem:[#allocation5 + $0x1c] sm:$0xf]
    %v73 = vld [vmem:[%s2] sm:$0x1]
    %v75 = vlaneseq
    %v76 = vshrl.u32 %v75, 7
    %v77 = vsub.s32 0, %v76
    %v78 = vrot.slane %v73, %v77
    %v82 = vunpack.c.l.b16 %v63
    %v83 = vunpack.c.l.b16 %v64
    %v84 = vpack.c.b16 %v83, %v82
    %v93 = vunpack.c.l.b16 %v65
    %v94 = vunpack.c.l.b16 %v66
    %v95 = vunpack.c.l.b16 %v67
    %v96 = vunpack.c.l.b16 %v68
    %v97 = vunpack.c.l.b16 %v69
    %v98 = vunpack.c.l.b16 %v70
    %v99 = vunpack.c.l.b16 %v71
    %v100 = vunpack.c.l.b16 %v72
    %v101 = vpack.c.b16 %v94, %v93
    %v102 = vpack.c.b16 %v96, %v95
    %v103 = vpack.c.b16 %v98, %v97
    %v104 = vpack.c.b16 %v100, %v99
    %vm109 = vcmask 523264
    %v111 = vsel %vm109, %v84, 0
    %113 = vmatprep.subr.bf16.mxu0 0
    %114 = vmatpush1.bf16.msra.mxu0 0
    %115 = vmatprep.subr.bf16.mxu0 0
    %116 = vmatpush1.bf16.msra.mxu0 0
    %117 = vmatprep.subr.bf16.mxu0 0
    %118 = vmatpush1.bf16.msra.mxu0 0
    %119 = vmatprep.subr.bf16.mxu0 0
    %120 = vmatpush1.bf16.msra.mxu0 0
    %121 = vmatprep.subr.bf16.mxu0 0
    %122 = vmatpush1.bf16.msra.mxu0 %v104
    %123 = vmatprep.subr.bf16.mxu0 0
    %124 = vmatpush1.bf16.msra.mxu0 %v103
    %125 = vmatprep.subr.bf16.mxu0 0
    %126 = vmatpush1.bf16.msra.mxu0 %v102
    %127 = vmatprep.subr.bf16.mxu0 0
    %128 = vmatpush1.bf16.msra.mxu0 %v101
    %129 = vmatprep.subr.bf16.mxu0 0
    %130 = vmatpush2.bf16.msra.mxu0 0
    %131 = vmatprep.subr.bf16.mxu0 0
    %132 = vmatpush2.bf16.msra.mxu0 0
    %133 = vmatprep.subr.bf16.mxu0 0
    %134 = vmatpush2.bf16.msra.mxu0 0
    %135 = vmatprep.subr.bf16.mxu0 0
    %136 = vmatpush2.bf16.msra.mxu0 0
    %137 = vmatprep.subr.bf16.mxu0 0
    %138 = vmatpush2.bf16.msra.mxu0 0
    %139 = vmatprep.subr.bf16.mxu0 0
    %140 = vmatpush2.bf16.msra.mxu0 0
    %141 = vmatprep.subr.bf16.mxu0 0
    %142 = vmatpush2.bf16.msra.mxu0 0
    %143 = vmatprep.subr.bf16.mxu0 0
    %144 = vmatpush2.bf16.msra.mxu0 0
    %145 = vmatprep.mubr.bf16.mxu0 0
    %146 = vmatmul.mubr.bf16.gmra.mxu0 %v111
    %v147 = vpop.f32.mrf.mxu0
    %v148 = vadd.f32 %v78, %v147
    %v149 = vpop.f32.mrf.mxu0
    %v150 = vpop.f32.mrf.mxu0
    %v151 = vadd.f32 %v78, %v150
    %v152 = vpop.f32.mrf.mxu0
    %153 = vdwg.mxu0
    %v154 = vmul.f32 %v148, 0.01
    %v155 = vmul.f32 %v151, 0.01
    %v156 = vmax.f32 %v148, %v154
    %v157 = vmax.f32 %v151, %v155
    %v158 = vpack.c.bf16 %v157, %v156
    %v159 = vld [vmem:[#allocation7] sm:$0xf]
    %v160 = vld [vmem:[#allocation7 + $0x4] sm:$0xf]
    %v161 = vld [vmem:[#allocation7 + $0x8] sm:$0xf]
    %v162 = vld [vmem:[#allocation7 + $0xc] sm:$0xf]
    %v163 = vld [vmem:[#allocation7 + $0x10] sm:$0xf]
    %v164 = vld [vmem:[#allocation7 + $0x14] sm:$0xf]
    %v165 = vld [vmem:[#allocation7 + $0x18] sm:$0xf]
    %v166 = vld [vmem:[#allocation7 + $0x1c] sm:$0xf]
    %v167 = vld [vmem:[#allocation7 + $0x20] sm:$0xf]
    %v168 = vld [vmem:[#allocation7 + $0x24] sm:$0xf]
    %v169 = vld [vmem:[#allocation7 + $0x28] sm:$0xf]
    %v170 = vld [vmem:[#allocation7 + $0x2c] sm:$0xf]
    %v171 = vld [vmem:[#allocation7 + $0x30] sm:$0xf]
    %v172 = vld [vmem:[#allocation7 + $0x34] sm:$0xf]
    %v173 = vld [vmem:[#allocation7 + $0x38] sm:$0xf]
    %v174 = vld [vmem:[#allocation7 + $0x3c] sm:$0xf]
    %v175 = vld [vmem:[%s4] sm:$0x1]
    %v177 = vlaneseq
    %v178 = vshrl.u32 %v177, 7
    %v179 = vsub.s32 0, %v178
    %v180 = vrot.slane %v175, %v179
    %v198 = vunpack.c.l.b16 %v159
    %v199 = vunpack.c.l.b16 %v160
    %v200 = vunpack.c.l.b16 %v161
    %v201 = vunpack.c.l.b16 %v162
    %v202 = vunpack.c.l.b16 %v163
    %v203 = vunpack.c.l.b16 %v164
    %v204 = vunpack.c.l.b16 %v165
    %v205 = vunpack.c.l.b16 %v166
    %v206 = vunpack.c.l.b16 %v167
    %v207 = vunpack.c.l.b16 %v168
    %v208 = vunpack.c.l.b16 %v169
    %v209 = vunpack.c.l.b16 %v170
    %v210 = vunpack.c.l.b16 %v171
    %v211 = vunpack.c.l.b16 %v172
    %v212 = vunpack.c.l.b16 %v173
    %v213 = vunpack.c.l.b16 %v174
    %v214 = vpack.c.b16 %v199, %v198
    %v215 = vpack.c.b16 %v201, %v200
    %v216 = vpack.c.b16 %v203, %v202
    %v217 = vpack.c.b16 %v205, %v204
    %v218 = vpack.c.b16 %v207, %v206
    %v219 = vpack.c.b16 %v209, %v208
    %v220 = vpack.c.b16 %v211, %v210
    %v221 = vpack.c.b16 %v213, %v212
    %230 = vmatprep.subr.bf16.mxu0 0
    %231 = vmatpush1.bf16.msra.mxu0 %v221
    %232 = vmatprep.subr.bf16.mxu0 0
    %233 = vmatpush1.bf16.msra.mxu0 %v220
    %234 = vmatprep.subr.bf16.mxu0 0
    %235 = vmatpush1.bf16.msra.mxu0 %v219
    %236 = vmatprep.subr.bf16.mxu0 0
    %237 = vmatpush1.bf16.msra.mxu0 %v218
    %238 = vmatprep.subr.bf16.mxu0 0
    %239 = vmatpush1.bf16.msra.mxu0 %v217
    %240 = vmatprep.subr.bf16.mxu0 0
    %241 = vmatpush1.bf16.msra.mxu0 %v216
    %242 = vmatprep.subr.bf16.mxu0 0
    %243 = vmatpush1.bf16.msra.mxu0 %v215
    %244 = vmatprep.subr.bf16.mxu0 0
    %245 = vmatpush1.bf16.msra.mxu0 %v214
    %246 = vmatprep.subr.bf16.mxu0 0
    %247 = vmatpush2.bf16.msra.mxu0 0
    %248 = vmatprep.subr.bf16.mxu0 0
    %249 = vmatpush2.bf16.msra.mxu0 0
    %250 = vmatprep.subr.bf16.mxu0 0
    %251 = vmatpush2.bf16.msra.mxu0 0
    %252 = vmatprep.subr.bf16.mxu0 0
    %253 = vmatpush2.bf16.msra.mxu0 0
    %254 = vmatprep.subr.bf16.mxu0 0
    %255 = vmatpush2.bf16.msra.mxu0 0
    %256 = vmatprep.subr.bf16.mxu0 0
    %257 = vmatpush2.bf16.msra.mxu0 0
    %258 = vmatprep.subr.bf16.mxu0 0
    %259 = vmatpush2.bf16.msra.mxu0 0
    %260 = vmatprep.subr.bf16.mxu0 0
    %261 = vmatpush2.bf16.msra.mxu0 0
    %262 = vmatprep.mubr.bf16.mxu0 0
    %263 = vmatmul.mubr.bf16.gmra.mxu0 %v158
    %v264 = vpop.f32.mrf.mxu0
    %v265 = vadd.f32 %v180, %v264
    %v266 = vpop.f32.mrf.mxu0
    %v267 = vpop.f32.mrf.mxu0
    %v268 = vadd.f32 %v180, %v267
    %v269 = vpop.f32.mrf.mxu0
    %270 = vdwg.mxu0
    %271 = vst [vmem:[#allocation8] sm:$0xff] %v265
    %272 = vst [vmem:[#allocation8 + $0x8] sm:$0xff] %v268
    // Predicated region
    $region34: #{tpu_custom_call.1} parent=1 // pred_check
      _
    $region35: #{tpu_custom_call.1} parent=1 // pred_check_branch
      %274 = sbr.rel (0) target = $region37
    $region36: #{tpu_custom_call.1} parent=1 // pred_region
      %s276 = ssub.s32 256, 256
      %277 = vsyncadd [#allocation4], %s276
      %s278 = sshll.u32 [#allocation8], 4
      %s279 = int_to_ptr.vmem [resolvable:$true] %s278
      %284 = dma.vmem_to_hbm [thread:$0]  %s279, 256, %s5, [#allocation4], 128, 128, 8
    $region37: #{tpu_custom_call.1} parent=1 // pred_fallthru
      _
    // Predicated region
    $region38: #{tpu_custom_call.1} parent=1 // pred_check
      _
    $region39: #{tpu_custom_call.1} parent=1 // pred_check_branch
      %286 = sbr.rel (0) target = $region41
    $region40: #{tpu_custom_call.1} parent=1 // pred_region
      %287 = dma.done [#allocation4], 256
    $region41: #{tpu_custom_call.1} parent=1 // pred_fallthru
      _
    %288 = vsyncpa [#allocation3], 1
    %289 = vsyncpa [#allocation6], 1
    %290 = vsyncpa [#allocation4], 1

// kernel: tpu_custom_call.1
$region0: #{tpu_custom_call.1}
  #allocation0 [shape = 'u32[]', space=smem, size = 0x4, offset = 0x4, fixed_abs, tag = 'smem constant byte address 0x4 - core index']
  #allocation1 [shape = 'u32[144,128]{1,0:T(1,128)}', space=vmem, size = 0x12000, scoped, tag = 'internal scratch']
  %s0 = inlined_call_operand.hbm [shape: bf16[16,64], index: 0, kind: input, shape index: {}]
  %s1 = inlined_call_operand.hbm [shape: bf16[64,128], index: 1, kind: input, shape index: {}]
  %s2 = inlined_call_operand.vmem [shape: f32[1,128], index: 2, kind: input, shape index: {}]
  %s3 = inlined_call_operand.hbm [shape: bf16[128,128], index: 3, kind: input, shape index: {}]
  %s4 = inlined_call_operand.vmem [shape: f32[1,128], index: 4, kind: input, shape index: {}]
  %s5 = inlined_call_operand.hbm [shape: f32[16,128], index: 5, kind: output, shape index: {}]
  %s6 = sld [smem:[#allocation0]]
  $region42: #{tpu_custom_call.1} parent=0
    _
  %s8 = ssub.s32 1, %s6
  %s9 = scalar_select 0, %s8, %s6
  $region1: #{tpu_custom_call.1} parent=0
    #allocation2 [shape = 'u8[4096]{0}', space=vmem, size = 0x1000, scoped, tag = 'input window, operand 0, single buffered']
    #allocation3 [shape = 's32[1]{0}', space=sflag, size = 0x4, scoped, tag = 'scoped memory for tpu_custom_call.1']
    #allocation4 [shape = 's32[1]{0}', space=sflag, size = 0x4, scoped, tag = 'scoped memory for tpu_custom_call.1']
    #allocation5 [shape = 'u8[16384]{0}', space=vmem, size = 0x4000, scoped, tag = 'input window, operand 1, single buffered']
    #allocation6 [shape = 's32[1]{0}', space=sflag, size = 0x4, scoped, tag = 'scoped memory for tpu_custom_call.1']
    #allocation7 [shape = 'u8[32768]{0}', space=vmem, size = 0x8000, scoped, tag = 'input window, operand 3, single buffered']
    #allocation8 [shape = 'u8[8192]{0}', space=vmem, size = 0x2000, scoped, tag = 'output window, operand 0, single buffered']
    %10 = vsyncpa [#allocation3], 0
    %11 = vsyncpa [#allocation6], 0
    %12 = vsyncpa [#allocation4], 0
    // Predicated region
    $region2: #{tpu_custom_call.1} parent=1 // pred_check
      _
    $region3: #{tpu_custom_call.1} parent=1 // pred_check_branch
      %14 = sbr.rel (0) target = $region5
    $region4: #{tpu_custom_call.1} parent=1 // pred_region
      %s16 = ssub.s32 128, 128
      %17 = vsyncadd [#allocation3], %s16
      %s18 = sshll.u32 [#allocation2], 4
      %s19 = int_to_ptr.vmem [resolvable:$true] %s18
      %24 = dma.hbm_to_vmem [thread:$0]  %s0, 128, %s19, [#allocation3], 64, 64, 4
    $region5: #{tpu_custom_call.1} parent=1 // pred_fallthru
      _
    // Predicated region
    $region6: #{tpu_custom_call.1} parent=1 // pred_check
      _
    $region7: #{tpu_custom_call.1} parent=1 // pred_check_branch
      %26 = sbr.rel (0) target = $region9
    $region8: #{tpu_custom_call.1} parent=1 // pred_region
      %s28 = ssub.s32 512, 512
      %29 = vsyncadd [#allocation6], %s28
      %s30 = sshll.u32 [#allocation5], 4
      %s31 = int_to_ptr.vmem [resolvable:$true] %s30
      %36 = dma.hbm_to_vmem [thread:$0]  %s1, 512, %s31, [#allocation6], 64, 64, 4
    $region9: #{tpu_custom_call.1} parent=1 // pred_fallthru
      _
    // Predicated region
    $region10: #{tpu_custom_call.1} parent=1 // pred_check
      _
    $region11: #{tpu_custom_call.1} parent=1 // pred_check_branch
      %38 = sbr.rel (0) target = $region13
    $region12: #{tpu_custom_call.1} parent=1 // pred_region
      _
    $region13: #{tpu_custom_call.1} parent=1 // pred_fallthru
      _
    // Predicated region
    $region14: #{tpu_custom_call.1} parent=1 // pred_check
      _
    $region15: #{tpu_custom_call.1} parent=1 // pred_check_branch
      %40 = sbr.rel (0) target = $region17
    $region16: #{tpu_custom_call.1} parent=1 // pred_region
      %s42 = ssub.s32 1024, 1024
      %43 = vsyncadd [#allocation6], %s42
      %s44 = sshll.u32 [#allocation7], 4
      %s45 = int_to_ptr.vmem [resolvable:$true] %s44
      %50 = dma.hbm_to_vmem [thread:$0]  %s3, 1024, %s45, [#allocation6], 64, 64, 4
    $region17: #{tpu_custom_call.1} parent=1 // pred_fallthru
      _
    // Predicated region
    $region18: #{tpu_custom_call.1} parent=1 // pred_check
      _
    $region19: #{tpu_custom_call.1} parent=1 // pred_check_branch
      %52 = sbr.rel (0) target = $region21
    $region20: #{tpu_custom_call.1} parent=1 // pred_region
      _
    $region21: #{tpu_custom_call.1} parent=1 // pred_fallthru
      _
    // Predicated region
    $region22: #{tpu_custom_call.1} parent=1 // pred_check
      _
    $region23: #{tpu_custom_call.1} parent=1 // pred_check_branch
      %54 = sbr.rel (0) target = $region25
    $region24: #{tpu_custom_call.1} parent=1 // pred_region
      %55 = dma.done [#allocation3], 128
    $region25: #{tpu_custom_call.1} parent=1 // pred_fallthru
      _
    // Predicated region
    $region26: #{tpu_custom_call.1} parent=1 // pred_check
      _
    $region27: #{tpu_custom_call.1} parent=1 // pred_check_branch
      %57 = sbr.rel (0) target = $region29
    $region28: #{tpu_custom_call.1} parent=1 // pred_region
      %58 = dma.done [#allocation6], 512
    $region29: #{tpu_custom_call.1} parent=1 // pred_fallthru
      _
    // Predicated region
    $region30: #{tpu_custom_call.1} parent=1 // pred_check
      _
    $region31: #{tpu_custom_call.1} parent=1 // pred_check_branch
      %60 = sbr.rel (0) target = $region33
    $region32: #{tpu_custom_call.1} parent=1 // pred_region
      %61 = dma.done [#allocation6], 1024
    $region33: #{tpu_custom_call.1} parent=1 // pred_fallthru
      _
    %v63 = vld [vmem:[#allocation2] sm:$0xf]
    %v64 = vld [vmem:[#allocation2 + $0x4] sm:$0xf]
    %v65 = vld [vmem:[#allocation5] sm:$0xf]
    %v66 = vld [vmem:[#allocation5 + $0x4] sm:$0xf]
    %v67 = vld [vmem:[#allocation5 + $0x8] sm:$0xf]
    %v68 = vld [vmem:[#allocation5 + $0xc] sm:$0xf]
    %v69 = vld [vmem:[#allocation5 + $0x10] sm:$0xf]
    %v70 = vld [vmem:[#allocation5 + $0x14] sm:$0xf]
    %v71 = vld [vmem:[#allocation5 + $0x18] sm:$0xf]
    %v72 = vld [vmem:[#allocation5 + $0x1c] sm:$0xf]
    %v73 = vld [vmem:[%s2] sm:$0x1]
    %v75 = vlaneseq
    %v76 = vshrl.u32 %v75, 7
    %v77 = vsub.s32 0, %v76
    %v78 = vrot.slane %v73, %v77
    %v82 = vunpack.c.l.b16 %v63
    %v83 = vunpack.c.l.b16 %v64
    %v84 = vpack.c.b16 %v83, %v82
    %v93 = vunpack.c.l.b16 %v65
    %v94 = vunpack.c.l.b16 %v66
    %v95 = vunpack.c.l.b16 %v67
    %v96 = vunpack.c.l.b16 %v68
    %v97 = vunpack.c.l.b16 %v69
    %v98 = vunpack.c.l.b16 %v70
    %v99 = vunpack.c.l.b16 %v71
    %v100 = vunpack.c.l.b16 %v72
    %v101 = vpack.c.b16 %v94, %v93
    %v102 = vpack.c.b16 %v96, %v95
    %v103 = vpack.c.b16 %v98, %v97
    %v104 = vpack.c.b16 %v100, %v99
    %vm109 = vcmask 523264
    %v111 = vsel %vm109, %v84, 0
    %113 = vmatprep.subr.bf16.mxu0 0
    %114 = vmatpush1.bf16.msra.mxu0 0
    %115 = vmatprep.subr.bf16.mxu0 0
    %116 = vmatpush1.bf16.msra.mxu0 0
    %117 = vmatprep.subr.bf16.mxu0 0
    %118 = vmatpush1.bf16.msra.mxu0 0
    %119 = vmatprep.subr.bf16.mxu0 0
    %120 = vmatpush1.bf16.msra.mxu0 0
    %121 = vmatprep.subr.bf16.mxu0 0
    %122 = vmatpush1.bf16.msra.mxu0 %v104
    %123 = vmatprep.subr.bf16.mxu0 0
    %124 = vmatpush1.bf16.msra.mxu0 %v103
    %125 = vmatprep.subr.bf16.mxu0 0
    %126 = vmatpush1.bf16.msra.mxu0 %v102
    %127 = vmatprep.subr.bf16.mxu0 0
    %128 = vmatpush1.bf16.msra.mxu0 %v101
    %129 = vmatprep.subr.bf16.mxu0 0
    %130 = vmatpush2.bf16.msra.mxu0 0
    %131 = vmatprep.subr.bf16.mxu0 0
    %132 = vmatpush2.bf16.msra.mxu0 0
    %133 = vmatprep.subr.bf16.mxu0 0
    %134 = vmatpush2.bf16.msra.mxu0 0
    %135 = vmatprep.subr.bf16.mxu0 0
    %136 = vmatpush2.bf16.msra.mxu0 0
    %137 = vmatprep.subr.bf16.mxu0 0
    %138 = vmatpush2.bf16.msra.mxu0 0
    %139 = vmatprep.subr.bf16.mxu0 0
    %140 = vmatpush2.bf16.msra.mxu0 0
    %141 = vmatprep.subr.bf16.mxu0 0
    %142 = vmatpush2.bf16.msra.mxu0 0
    %143 = vmatprep.subr.bf16.mxu0 0
    %144 = vmatpush2.bf16.msra.mxu0 0
    %145 = vmatprep.mubr.bf16.mxu0 0
    %146 = vmatmul.mubr.bf16.gmra.mxu0 %v111
    %v147 = vpop.f32.mrf.mxu0
    %v148 = vadd.f32 %v78, %v147
    %v149 = vpop.f32.mrf.mxu0
    %v150 = vpop.f32.mrf.mxu0
    %v151 = vadd.f32 %v78, %v150
    %v152 = vpop.f32.mrf.mxu0
    %153 = vdwg.mxu0
    %v154 = vmul.f32 %v148, 0.01
    %v155 = vmul.f32 %v151, 0.01
    %v156 = vmax.f32 %v148, %v154
    %v157 = vmax.f32 %v151, %v155
    %v158 = vpack.c.bf16 %v157, %v156
    %v159 = vld [vmem:[#allocation7] sm:$0xf]
    %v160 = vld [vmem:[#allocation7 + $0x4] sm:$0xf]
    %v161 = vld [vmem:[#allocation7 + $0x8] sm:$0xf]
    %v162 = vld [vmem:[#allocation7 + $0xc] sm:$0xf]
    %v163 = vld [vmem:[#allocation7 + $0x10] sm:$0xf]
    %v164 = vld [vmem:[#allocation7 + $0x14] sm:$0xf]
    %v165 = vld [vmem:[#allocation7 + $0x18] sm:$0xf]
    %v166 = vld [vmem:[#allocation7 + $0x1c] sm:$0xf]
    %v167 = vld [vmem:[#allocation7 + $0x20] sm:$0xf]
    %v168 = vld [vmem:[#allocation7 + $0x24] sm:$0xf]
    %v169 = vld [vmem:[#allocation7 + $0x28] sm:$0xf]
    %v170 = vld [vmem:[#allocation7 + $0x2c] sm:$0xf]
    %v171 = vld [vmem:[#allocation7 + $0x30] sm:$0xf]
    %v172 = vld [vmem:[#allocation7 + $0x34] sm:$0xf]
    %v173 = vld [vmem:[#allocation7 + $0x38] sm:$0xf]
    %v174 = vld [vmem:[#allocation7 + $0x3c] sm:$0xf]
    %v175 = vld [vmem:[%s4] sm:$0x1]
    %v177 = vlaneseq
    %v178 = vshrl.u32 %v177, 7
    %v179 = vsub.s32 0, %v178
    %v180 = vrot.slane %v175, %v179
    %v198 = vunpack.c.l.b16 %v159
    %v199 = vunpack.c.l.b16 %v160
    %v200 = vunpack.c.l.b16 %v161
    %v201 = vunpack.c.l.b16 %v162
    %v202 = vunpack.c.l.b16 %v163
    %v203 = vunpack.c.l.b16 %v164
    %v204 = vunpack.c.l.b16 %v165
    %v205 = vunpack.c.l.b16 %v166
    %v206 = vunpack.c.l.b16 %v167
    %v207 = vunpack.c.l.b16 %v168
    %v208 = vunpack.c.l.b16 %v169
    %v209 = vunpack.c.l.b16 %v170
    %v210 = vunpack.c.l.b16 %v171
    %v211 = vunpack.c.l.b16 %v172
    %v212 = vunpack.c.l.b16 %v173
    %v213 = vunpack.c.l.b16 %v174
    %v214 = vpack.c.b16 %v199, %v198
    %v215 = vpack.c.b16 %v201, %v200
    %v216 = vpack.c.b16 %v203, %v202
    %v217 = vpack.c.b16 %v205, %v204
    %v218 = vpack.c.b16 %v207, %v206
    %v219 = vpack.c.b16 %v209, %v208
    %v220 = vpack.c.b16 %v211, %v210
    %v221 = vpack.c.b16 %v213, %v212
    %230 = vmatprep.subr.bf16.mxu0 0
    %231 = vmatpush1.bf16.msra.mxu0 %v221
    %232 = vmatprep.subr.bf16.mxu0 0
    %233 = vmatpush1.bf16.msra.mxu0 %v220
    %234 = vmatprep.subr.bf16.mxu0 0
    %235 = vmatpush1.bf16.msra.mxu0 %v219
    %236 = vmatprep.subr.bf16.mxu0 0
    %237 = vmatpush1.bf16.msra.mxu0 %v218
    %238 = vmatprep.subr.bf16.mxu0 0
    %239 = vmatpush1.bf16.msra.mxu0 %v217
    %240 = vmatprep.subr.bf16.mxu0 0
    %241 = vmatpush1.bf16.msra.mxu0 %v216
    %242 = vmatprep.subr.bf16.mxu0 0
    %243 = vmatpush1.bf16.msra.mxu0 %v215
    %244 = vmatprep.subr.bf16.mxu0 0
    %245 = vmatpush1.bf16.msra.mxu0 %v214
    %246 = vmatprep.subr.bf16.mxu0 0
    %247 = vmatpush2.bf16.msra.mxu0 0
    %248 = vmatprep.subr.bf16.mxu0 0
    %249 = vmatpush2.bf16.msra.mxu0 0
    %250 = vmatprep.subr.bf16.mxu0 0
    %251 = vmatpush2.bf16.msra.mxu0 0
    %252 = vmatprep.subr.bf16.mxu0 0
    %253 = vmatpush2.bf16.msra.mxu0 0
    %254 = vmatprep.subr.bf16.mxu0 0
    %255 = vmatpush2.bf16.msra.mxu0 0
    %256 = vmatprep.subr.bf16.mxu0 0
    %257 = vmatpush2.bf16.msra.mxu0 0
    %258 = vmatprep.subr.bf16.mxu0 0
    %259 = vmatpush2.bf16.msra.mxu0 0
    %260 = vmatprep.subr.bf16.mxu0 0
    %261 = vmatpush2.bf16.msra.mxu0 0
    %262 = vmatprep.mubr.bf16.mxu0 0
    %263 = vmatmul.mubr.bf16.gmra.mxu0 %v158
    %v264 = vpop.f32.mrf.mxu0
    %v265 = vadd.f32 %v180, %v264
    %v266 = vpop.f32.mrf.mxu0
    %v267 = vpop.f32.mrf.mxu0
    %v268 = vadd.f32 %v180, %v267
    %v269 = vpop.f32.mrf.mxu0
    %270 = vdwg.mxu0
    %271 = vst [vmem:[#allocation8] sm:$0xff] %v265
    %272 = vst [vmem:[#allocation8 + $0x8] sm:$0xff] %v268
    // Predicated region
    $region34: #{tpu_custom_call.1} parent=1 // pred_check
      _
    $region35: #{tpu_custom_call.1} parent=1 // pred_check_branch
      %274 = sbr.rel (0) target = $region37
    $region36: #{tpu_custom_call.1} parent=1 // pred_region
      %s276 = ssub.s32 256, 256
      %277 = vsyncadd [#allocation4], %s276
      %s278 = sshll.u32 [#allocation8], 4
      %s279 = int_to_ptr.vmem [resolvable:$true] %s278
      %284 = dma.vmem_to_hbm [thread:$0]  %s279, 256, %s5, [#allocation4], 128, 128, 8
    $region37: #{tpu_custom_call.1} parent=1 // pred_fallthru
      _
    // Predicated region
    $region38: #{tpu_custom_call.1} parent=1 // pred_check
      _
    $region39: #{tpu_custom_call.1} parent=1 // pred_check_branch
      %286 = sbr.rel (0) target = $region41
    $region40: #{tpu_custom_call.1} parent=1 // pred_region
      %287 = dma.done [#allocation4], 256
    $region41: #{tpu_custom_call.1} parent=1 // pred_fallthru
      _
    %288 = vsyncpa [#allocation3], 1
    %289 = vsyncpa [#allocation6], 1
    %290 = vsyncpa [#allocation4], 1

</llo_original>
